<compile_context>
chip_gen: v7x
topology: tpu7x:2x2x1
jax: 0.10.0
libtpu: 0.0.40
codegen_flags: <defaults>
</compile_context>

<pallas_src>
import jax
import jax.numpy as jnp
from jax import lax
from jax.experimental import pallas as pl
from jax.experimental.pallas import tpu as pltpu


# ----------------------------- planning -------------------------------------


def _round_up(x, m):
    return ((x + m - 1) // m) * m


def _vmem_capacity_bytes():
    try:
        return int(pltpu.get_tpu_info().vmem_capacity_bytes)
    except Exception:
        return 64 << 20          # conservative: v7x has 64 MiB per TensorCore


def _plan(c, n, esize):
    """Choose (tn, n_pad, use_stash, vmem_limit_bytes) from the VMEM budget."""
    cap = _vmem_capacity_bytes()
    budget = max(cap - (16 << 20), 24 << 20)     # headroom for Mosaic internals
    energy_b = c * c * 4                         # f32 gram / attention scratch

    def need(tn, n_pad, stash):
        blocks = 4 * c * tn * esize              # double-buffered x-in + out
        return energy_b + blocks + (c * n_pad * esize if stash else 0)

    plan = None
    # Case 1: whole position axis as one full-extent tile (no padding needed).
    if need(n, n, True) <= budget:
        plan = (n, n, True)
    if plan is None:
        n128 = _round_up(n, 128)
        # Case 2: big 128-multiple tiles, x stashed in VMEM (x read from HBM once).
        for t in (4096, 2048, 1024, 512, 256, 128):
            if t > n128:
                continue
            n_pad = _round_up(n, t)
            if need(t, n_pad, True) <= budget:
                plan = (t, n_pad, True)
                break
    if plan is None:
        # Case 3: stash does not fit -> phase 2 re-reads x tiles from HBM.
        for t in (4096, 2048, 1024, 512, 256, 128):
            if t > _round_up(n, 128):
                continue
            if need(t, _round_up(n, t), False) <= budget:
                plan = (t, _round_up(n, t), False)
                break
    if plan is None:
        plan = (128, _round_up(n, 128), False)

    tn, n_pad, use_stash = plan
    vmem_limit = int(min(cap - (8 << 20),
                         max(need(tn, n_pad, use_stash) + (8 << 20), 32 << 20)))
    return tn, n_pad, use_stash, vmem_limit


# ------------------------------ kernel --------------------------------------


def _make_cam_kernel(n_tiles, use_stash):
    """Fused CAM kernel; grid axis 1 has 2*n_tiles steps (gram then apply)."""

    def kernel(gamma_ref, x_ref, out_ref, energy_ref, *stash):
        x_stash = stash[0] if use_stash else None
        t = pl.program_id(1)

        # -------- phase 1: accumulate gram, finalize softmax in VMEM --------
        @pl.when(t < n_tiles)
        def _phase1():
            @pl.when(t == 0)
            def _init():
                energy_ref[...] = jnp.zeros_like(energy_ref)

            xt = x_ref[0]                                      # (C, tn)
            if use_stash:
                x_stash[t] = xt                                # keep for phase 2

            # energy[i, j] += sum_n x[i, n] * x[j, n] -- contract the lane dims
            # of both operands directly (flash-attn q@k^T form, no explicit X.T).
            energy_ref[...] += lax.dot_general(
                xt, xt, (((1,), (1,)), ((), ())),
                preferred_element_type=jnp.float32)

            @pl.when(t == n_tiles - 1)
            def _finalize():
                energy = energy_ref[...]                       # (C, C) f32
                # softmax(rowmax(E) - E) stabilized == exp(rowmin(E) - E)/sum
                e = jnp.exp(jnp.min(energy, axis=-1, keepdims=True) - energy)
                denom = jnp.sum(e, axis=-1, keepdims=True)
                energy_ref[...] = e * pl.reciprocal(denom, approx=True)

        # -------- phase 2: out_tile = gamma * attn @ x_tile + x_tile ---------
        @pl.when(t >= n_tiles)
        def _phase2():
            if use_stash:
                xt = x_stash[t - n_tiles]                      # (C, tn)
            else:
                xt = x_ref[0]                                  # re-read from HBM
            attn = energy_ref[...].astype(xt.dtype)            # (C, C)
            o = jnp.dot(attn, xt, preferred_element_type=jnp.float32)
            gamma = gamma_ref[0]                               # scalar from SMEM
            out_ref[0] = (gamma * o + xt.astype(jnp.float32)).astype(out_ref.dtype)

    return kernel


# ------------------------------ wrapper --------------------------------------


def cam_forward(x_nchw, gamma):
    """x_nchw: (B, C, H, W); gamma: (1,) (torch nn.Parameter(torch.zeros(1)))."""
    b, c, h, w = x_nchw.shape
    n = h * w
    dt = x_nchw.dtype
    esize = jnp.dtype(dt).itemsize

    tn, n_pad, use_stash, vmem_limit = _plan(c, n, esize)
    n_tiles = n_pad // tn

    x_cn = x_nchw.reshape(b, c, n)                             # == torch .view(b, c, -1)
    if n_pad != n:
        # zero columns contribute nothing to the gram; sliced off the output.
        x_cn = jnp.pad(x_cn, ((0, 0), (0, 0), (0, n_pad - n)))

    gamma_f32 = jnp.asarray(gamma, jnp.float32).reshape((1,))

    if use_stash:
        # hold the last tile during phase 2 -> no redundant x DMAs
        x_index_map = lambda i, t: (i, 0, jnp.minimum(t, n_tiles - 1))
    else:
        x_index_map = lambda i, t: (i, 0, jnp.where(t < n_tiles, t, t - n_tiles))
    # output blocks only become live / written during phase 2
    out_index_map = lambda i, t: (i, 0, jnp.where(t < n_tiles, 0, t - n_tiles))

    scratch = [pltpu.VMEM((c, c), jnp.float32)]                # gram -> attention
    if use_stash:
        scratch.append(pltpu.VMEM((n_tiles, c, tn), dt))       # x stash (= C x N_pad)

    out_cn = pl.pallas_call(
        _make_cam_kernel(n_tiles, use_stash),
        out_shape=jax.ShapeDtypeStruct((b, c, n_pad), dt),
        grid=(b, 2 * n_tiles),
        in_specs=[
            pl.BlockSpec(memory_space=pltpu.MemorySpace.SMEM),  # gamma (scalar)
            pl.BlockSpec((1, c, tn), x_index_map),              # x position tiles
        ],
        out_specs=pl.BlockSpec((1, c, tn), out_index_map),
        scratch_shapes=scratch,
        compiler_params=pltpu.CompilerParams(
            dimension_semantics=("parallel", "arbitrary"),
            vmem_limit_bytes=vmem_limit),
    )(gamma_f32, x_cn)

    if n_pad != n:
        out_cn = out_cn[:, :, :n]
    return out_cn.reshape(b, c, h, w)


# ----------------------------- reference -------------------------------------


def cam_reference(x, gamma):
    """Pure-JAX replica of the PyTorch CAM_Module forward (NCHW)."""
    b, c, h, w = x.shape
    v = x.reshape(b, c, h * w)                                  # (B, C, N)
    energy = jnp.einsum('bin,bjn->bij', v, v)                   # (B, C, C)
    energy_new = jnp.max(energy, axis=-1, keepdims=True) - energy
    attn = jax.nn.softmax(energy_new, axis=-1)
    out = jnp.einsum('bij,bjn->bin', attn, v).reshape(b, c, h, w)
    return gamma[0] * out + x


if __name__ == "__main__":
    B, C, H, W = 2, 32, 16, 16           # N = H*W = 256 -> lane-dense position axis

    key = jax.random.PRNGKey(0)
    x = 0.1 * jax.random.normal(key, (B, C, H, W), dtype=jnp.float32)

    # nn.Parameter(torch.zeros(1)) starts at 0; use 0.5 so the attention
    # branch actually contributes and the kernel is exercised end to end.
    gamma = jnp.full((1,), 0.5, dtype=jnp.float32)

    out = cam_forward(x, gamma)
    out = jax.block_until_ready(out)

    ref = cam_reference(x, gamma)
    assert out.shape == (B, C, H, W)
    # tolerance covers the approx (EUP) reciprocal in the softmax denominator
    assert jnp.allclose(out, ref, rtol=2e-3, atol=2e-3), "mismatch vs reference"

    print("KERNEL_OK")
</pallas_src>

<mosaic_0001>
module attributes {stable_mosaic.version = 11 : i64} {
  func.func @kernel(%arg0: i32, %arg1: i32, %arg2: memref<1xf32, #tpu.memory_space<smem>>, %arg3: memref<1x32x256xf32, #tpu.memory_space<vmem>>, %arg4: memref<1x32x256xf32, #tpu.memory_space<vmem>>, %arg5: memref<32x32xf32, #tpu.memory_space<vmem>>, %arg6: memref<1x32x256xf32, #tpu.memory_space<vmem>>) attributes {dimension_semantics = [#tpu.dimension_semantics<parallel>, #tpu.dimension_semantics<arbitrary>], iteration_bounds = array<i64: 2, 2>, scalar_prefetch = 0 : i64, scratch_operands = 2 : i64, tpu.core_type = #tpu.core_type<tc>, window_params = [{transform_indices = @transform_0, window_bounds = array<i64: 1>}, {transform_indices = @transform_1, window_bounds = array<i64: 1, 32, 256>}, {transform_indices = @transform_2, window_bounds = array<i64: 1, 32, 256>}]} {
    %c1_i32 = arith.constant 1 : i32
    %0 = arith.cmpi slt, %arg1, %c1_i32 : i32
    %1 = arith.extui %0 : i1 to i32
    %c0_i32 = arith.constant 0 : i32
    %2 = arith.cmpi ne, %1, %c0_i32 : i32
    scf.if %2 {
      %c0_i32_2 = arith.constant 0 : i32
      %6 = arith.cmpi eq, %arg1, %c0_i32_2 : i32
      %7 = arith.extui %6 : i1 to i32
      %c0_i32_3 = arith.constant 0 : i32
      %8 = arith.cmpi ne, %7, %c0_i32_3 : i32
      scf.if %8 {
        %cst_14 = arith.constant 0.000000e+00 : f32
        %22 = vector.broadcast %cst_14 : f32 to vector<32x32xf32>
        %c0_15 = arith.constant 0 : index
        %c0_16 = arith.constant 0 : index
        %23 = vector.load %arg5[%c0_15, %c0_16] : memref<32x32xf32, #tpu.memory_space<vmem>>, vector<32x32xf32>
        tpu.vector_store %arg5[%c0_15, %c0_16], %22 {strides = array<i32>} : memref<32x32xf32, #tpu.memory_space<vmem>>, vector<32x32xf32>,
      } else {
      }
      %c0 = arith.constant 0 : index
      %c0_4 = arith.constant 0 : index
      %c0_5 = arith.constant 0 : index
      %9 = vector.load %arg3[%c0, %c0_4, %c0_5] : memref<1x32x256xf32, #tpu.memory_space<vmem>>, vector<1x32x256xf32>
      %10 = vector.shape_cast %9 : vector<1x32x256xf32> to vector<32x256xf32>
      %11 = arith.index_cast %arg1 : i32 to index
      %c0_6 = arith.constant 0 : index
      %c0_7 = arith.constant 0 : index
      %12 = vector.load %arg6[%11, %c0_6, %c0_7] : memref<1x32x256xf32, #tpu.memory_space<vmem>>, vector<1x32x256xf32>
      %13 = vector.shape_cast %12 : vector<1x32x256xf32> to vector<32x256xf32>
      %14 = vector.shape_cast %10 : vector<32x256xf32> to vector<1x32x256xf32>
      tpu.vector_store %arg6[%11, %c0_6, %c0_7], %14 {strides = array<i32>} : memref<1x32x256xf32, #tpu.memory_space<vmem>>, vector<1x32x256xf32>,
      %c0_8 = arith.constant 0 : index
      %c0_9 = arith.constant 0 : index
      %15 = vector.load %arg5[%c0_8, %c0_9] : memref<32x32xf32, #tpu.memory_space<vmem>>, vector<32x32xf32>
      %cst = arith.constant dense<0.000000e+00> : vector<32x32xf32>
      %16 = tpu.matmul %10, %10, %cst {dimension_numbers = #tpu.dot_dimension_numbers<[1], [1], [0], [0], [0, 0, 1, 0], [], []>} : vector<32x256xf32>, vector<32x256xf32>, vector<32x32xf32> -> vector<32x32xf32>
      %17 = arith.addf %15, %16 : vector<32x32xf32>
      %c0_10 = arith.constant 0 : index
      %c0_11 = arith.constant 0 : index
      %18 = vector.load %arg5[%c0_10, %c0_11] : memref<32x32xf32, #tpu.memory_space<vmem>>, vector<32x32xf32>
      tpu.vector_store %arg5[%c0_10, %c0_11], %17 {strides = array<i32>} : memref<32x32xf32, #tpu.memory_space<vmem>>, vector<32x32xf32>,
      %c0_i32_12 = arith.constant 0 : i32
      %19 = arith.cmpi eq, %arg1, %c0_i32_12 : i32
      %20 = arith.extui %19 : i1 to i32
      %c0_i32_13 = arith.constant 0 : i32
      %21 = arith.cmpi ne, %20, %c0_i32_13 : i32
      scf.if %21 {
        %c0_14 = arith.constant 0 : index
        %c0_15 = arith.constant 0 : index
        %22 = vector.load %arg5[%c0_14, %c0_15] : memref<32x32xf32, #tpu.memory_space<vmem>>, vector<32x32xf32>
        %cst_16 = arith.constant dense<0x7F800000> : vector<32xf32>
        %23 = vector.multi_reduction <minimumf>, %22, %cst_16 [1] : vector<32x32xf32> to vector<32xf32>
        %24 = vector.shape_cast %23 : vector<32xf32> to vector<32x1xf32>
        %25 = vector.broadcast %24 : vector<32x1xf32> to vector<32x32xf32>
        %26 = arith.subf %25, %22 : vector<32x32xf32>
        %27 = math.exp %26 : vector<32x32xf32>
        %cst_17 = arith.constant dense<0.000000e+00> : vector<32xf32>
        %28 = vector.multi_reduction <add>, %27, %cst_17 [1] : vector<32x32xf32> to vector<32xf32>
        %29 = vector.shape_cast %28 : vector<32xf32> to vector<32x1xf32>
        %30 = tpu.reciprocal %29 {approx = true} : vector<32x1xf32> -> vector<32x1xf32>
        %31 = vector.broadcast %30 : vector<32x1xf32> to vector<32x32xf32>
        %32 = arith.mulf %27, %31 : vector<32x32xf32>
        %c0_18 = arith.constant 0 : index
        %c0_19 = arith.constant 0 : index
        %33 = vector.load %arg5[%c0_18, %c0_19] : memref<32x32xf32, #tpu.memory_space<vmem>>, vector<32x32xf32>
        tpu.vector_store %arg5[%c0_18, %c0_19], %32 {strides = array<i32>} : memref<32x32xf32, #tpu.memory_space<vmem>>, vector<32x32xf32>,
      } else {
      }
    } else {
    }
    %c1_i32_0 = arith.constant 1 : i32
    %3 = arith.cmpi sge, %arg1, %c1_i32_0 : i32
    %4 = arith.extui %3 : i1 to i32
    %c0_i32_1 = arith.constant 0 : i32
    %5 = arith.cmpi ne, %4, %c0_i32_1 : i32
    scf.if %5 {
      %c1_i32_2 = arith.constant 1 : i32
      %6 = arith.subi %arg1, %c1_i32_2 : i32
      %7 = arith.index_cast %6 : i32 to index
      %c0 = arith.constant 0 : index
      %c0_3 = arith.constant 0 : index
      %8 = vector.load %arg6[%7, %c0, %c0_3] : memref<1x32x256xf32, #tpu.memory_space<vmem>>, vector<1x32x256xf32>
      %9 = vector.shape_cast %8 : vector<1x32x256xf32> to vector<32x256xf32>
      %c0_4 = arith.constant 0 : index
      %c0_5 = arith.constant 0 : index
      %10 = vector.load %arg5[%c0_4, %c0_5] : memref<32x32xf32, #tpu.memory_space<vmem>>, vector<32x32xf32>
      %cst = arith.constant dense<0.000000e+00> : vector<32x256xf32>
      %11 = tpu.matmul %10, %9, %cst {dimension_numbers = #tpu.dot_dimension_numbers<[1], [0], [0], [1], [0, 0, 1, 1], [], []>} : vector<32x32xf32>, vector<32x256xf32>, vector<32x256xf32> -> vector<32x256xf32>
      %c0_6 = arith.constant 0 : index
      %12 = memref.load %arg2[%c0_6] : memref<1xf32, #tpu.memory_space<smem>>
      %13 = vector.broadcast %12 : f32 to vector<32x256xf32>
      %14 = arith.mulf %13, %11 : vector<32x256xf32>
      %15 = arith.addf %14, %9 : vector<32x256xf32>
      %c0_7 = arith.constant 0 : index
      %c0_8 = arith.constant 0 : index
      %c0_9 = arith.constant 0 : index
      %16 = vector.load %arg4[%c0_7, %c0_8, %c0_9] : memref<1x32x256xf32, #tpu.memory_space<vmem>>, vector<1x32x256xf32>
      %17 = vector.shape_cast %16 : vector<1x32x256xf32> to vector<32x256xf32>
      %18 = vector.shape_cast %15 : vector<32x256xf32> to vector<1x32x256xf32>
      tpu.vector_store %arg4[%c0_7, %c0_8, %c0_9], %18 {strides = array<i32>} : memref<1x32x256xf32, #tpu.memory_space<vmem>>, vector<1x32x256xf32>,
    } else {
    }
    return
  }
  func.func @transform_0(%arg0: i32, %arg1: i32) -> i32 {
    %c0_i32 = arith.constant 0 : i32
    %c0_i32_0 = arith.constant 0 : i32
    return %c0_i32 : i32
  }
  func.func @transform_1(%arg0: i32, %arg1: i32) -> (i32, i32, i32) {
    %c0_i32 = arith.constant 0 : i32
    %0 = arith.minsi %arg1, %c0_i32 : i32
    %c0_i32_0 = arith.constant 0 : i32
    %c0_i32_1 = arith.constant 0 : i32
    return %arg0, %c0_i32_0, %0 : i32, i32, i32
  }
  func.func @transform_2(%arg0: i32, %arg1: i32) -> (i32, i32, i32) {
    %c1_i32 = arith.constant 1 : i32
    %0 = arith.cmpi slt, %arg1, %c1_i32 : i32
    %c1_i32_0 = arith.constant 1 : i32
    %1 = arith.subi %arg1, %c1_i32_0 : i32
    %c0_i32 = arith.constant 0 : i32
    %2 = arith.select %0, %c0_i32, %1 : i32
    %c0_i32_1 = arith.constant 0 : i32
    %c0_i32_2 = arith.constant 0 : i32
    return %arg0, %c0_i32_1, %2 : i32, i32, i32
  }
}

</mosaic_0001>

<llo_original>
// kernel: tpu_custom_call.1
$region0: #{tpu_custom_call.1}
  #allocation0 [shape = 'u32[]', space=smem, size = 0x4, offset = 0x4, fixed_abs, tag = 'smem constant byte address 0x4 - core index']
  #allocation1 [shape = 'u32[144,128]{1,0:T(1,128)}', space=vmem, size = 0x12000, scoped, tag = 'internal scratch']
  #allocation2 [shape = 'f32[32,32]{1,0:T(8,128)}', space=vmem, size = 0x4000, scoped, tag = 'scratch operand']
  #allocation3 [shape = 'f32[1,32,256]{2,1,0:T(8,128)}', space=vmem, size = 0x8000, scoped, tag = 'scratch operand']
  #allocation4 [shape = 'f32[1]{0:T(128)S(6)}', space=smem, size = 0x200, scoped, tag = 'scoped memory for tpu_custom_call.1']
  %s0 = inlined_call_operand.<no memory space> [shape: f32[1], index: 0, kind: input, shape index: {}]
  %s1 = inlined_call_operand.hbm [shape: f32[2,32,256], index: 1, kind: input, shape index: {}]
  %s2 = inlined_call_operand.hbm [shape: f32[2,32,256], index: 2, kind: output, shape index: {}]
  %s3 = sld [smem:[#allocation0]]
  $region61: #{tpu_custom_call.1} parent=0
    _
  %s5 = ssub.s32 1, %s3
  %s6 = scalar_select 0, %s5, %s3
  %7 = sst [smem:[#allocation4]] %s0
  $region1: #{tpu_custom_call.1} parent=0
    #allocation5 [shape = 'u8[65536]{0}', space=vmem, size = 0x10000, scoped, tag = 'input window, operand 1']
    #allocation6 [shape = 's32[2]{0}', space=sflag, size = 0x8, scoped, tag = 'scoped memory for tpu_custom_call.1']
    #allocation7 [shape = 's32[2]{0}', space=sflag, size = 0x8, scoped, tag = 'scoped memory for tpu_custom_call.1']
    #allocation8 [shape = 'u8[65536]{0}', space=vmem, size = 0x10000, scoped, tag = 'output window, operand 0']
    %8 = vsyncpa [#allocation6], 0
    %s9 = scalar_lea.sflag [#allocation6], 1
    %10 = vsyncpa %s9, 0
    %11 = vsyncpa [#allocation7], 0
    %s12 = scalar_lea.sflag [#allocation7], 1
    %13 = vsyncpa %s12, 0
    loop: start=0, step=1, limit=6
    $region2: #{tpu_custom_call.1} parent=1 // loop_pre_header
      _
    $region3: #{tpu_custom_call.1} parent=1 // loop_header
      %s15 = sphi 0, %s19
      %p16 = scmp.ge.s32.totalorder %s15, 6
      %s22 = sphi 0, %s34
      %s23 = sphi 0, %s30
      %s24 = sphi 0, %s22
      %s25 = sphi 0, %s23
      %s26 = sphi 0, %s24
      %s27 = sphi 0, %s25
      %s35 = sphi 0, %s35
      %s37 = sphi 0, %s35
      %s38 = sphi 0, %s37
      %s52 = sphi 0, %s38
      %s64 = sphi 0, %s66
      %s67 = sphi 0, %s64
      %s68 = sphi 0, %s67
      %s84 = sphi 0, %s68
      %s98 = sphi 0, %s100
      %s101 = sphi 0, %s98
      %s102 = sphi 0, %s101
      %s118 = sphi 0, %s102
    $region4: #{tpu_custom_call.1} parent=1 // loop_header_branch
      %18 = sbr.rel (%p16) target = $region8
    $region5: #{tpu_custom_call.1} parent=1 // loop_body
      %s20 = ssub.s32 %s15, 1
      %s21 = ssub.s32 %s15, 2
      %s28 = sadd.s32 1, %s23
      %p29 = scmp.ge.s32.totalorder %s28, 2
      %s30 = scalar_select %p29, 0, %s28
      %s31 = sadd.s32 1, %s22
      %s32 = scalar_select %p29, %s31, %s22
      %p33 = scmp.ge.s32.totalorder %s32, 2
      %s34 = scalar_select %p33, 0, %s32
      %s36 = sadd.s32 %s35, 1
      %p39 = scmp.eq.s32.totalorder %s15, 3
      %p40 = scmp.ne.s32.totalorder %s35, %s37
      %p41 = scmp.eq.s32.totalorder %s15, 0
      %p42 = por %p40, %p41
      %p43 = scmp.ne.s32.totalorder %s35, %s37
      %p44 = scmp.eq.s32.totalorder %s20, 3
      %p45 = por %p43, %p44
      %p46 = scmp.ne.s32.totalorder %s37, %s38
      %p47 = scmp.eq.s32.totalorder %s20, 0
      %p48 = por %p46, %p47
      %p49 = scmp.ne.s32.totalorder %s37, %s38
      %p50 = scmp.eq.s32.totalorder %s21, 3
      %p51 = por %p49, %p50
      %p53 = scmp.ne.s32.totalorder %s38, %s52
      %p54 = scmp.eq.s32.totalorder %s21, 0
      %p55 = por %p53, %p54
      %p56 = scmp.lt.s32.totalorder %s23, 0
      %s57 = scalar_select %p56, %s23, 0
      %p58 = scmp.lt.s32.totalorder %s30, 0
      %s59 = scalar_select %p58, %s30, 0
      %s60 = ssub.s32 %s22, %s34
      %s61 = ssub.s32 %s57, %s59
      %s62 = sor.u32 %s60, %s61
      %p63 = scmp.eq.s32.totalorder %s62, 0
      %s65 = sadd.s32 %s64, 1
      %s66 = scalar_select %p63, %s64, %s65
      %p69 = pneg %p63
      %p70 = scmp.eq.s32.totalorder %s15, 3
      %p71 = por %p69, %p70
      %p72 = scmp.ne.s32.totalorder %s64, %s67
      %p73 = scmp.eq.s32.totalorder %s15, 0
      %p74 = por %p72, %p73
      %p75 = scmp.ne.s32.totalorder %s64, %s67
      %p76 = scmp.eq.s32.totalorder %s20, 3
      %p77 = por %p75, %p76
      %p78 = scmp.ne.s32.totalorder %s67, %s68
      %p79 = scmp.eq.s32.totalorder %s20, 0
      %p80 = por %p78, %p79
      %p81 = scmp.ne.s32.totalorder %s67, %s68
      %p82 = scmp.eq.s32.totalorder %s21, 3
      %p83 = por %p81, %p82
      %p85 = scmp.ne.s32.totalorder %s68, %s84
      %p86 = scmp.eq.s32.totalorder %s21, 0
      %p87 = por %p85, %p86
      %p88 = scmp.lt.s32.totalorder %s23, 1
      %s89 = ssub.s32 %s23, 1
      %s90 = scalar_select %p88, 0, %s89
      %p91 = scmp.lt.s32.totalorder %s30, 1
      %s92 = ssub.s32 %s30, 1
      %s93 = scalar_select %p91, 0, %s92
      %s94 = ssub.s32 %s22, %s34
      %s95 = ssub.s32 %s90, %s93
      %s96 = sor.u32 %s94, %s95
      %p97 = scmp.eq.s32.totalorder %s96, 0
      %s99 = sadd.s32 %s98, 1
      %s100 = scalar_select %p97, %s98, %s99
      %p103 = pneg %p97
      %p104 = scmp.eq.s32.totalorder %s15, 3
      %p105 = por %p103, %p104
      %p106 = scmp.ne.s32.totalorder %s98, %s101
      %p107 = scmp.eq.s32.totalorder %s15, 0
      %p108 = por %p106, %p107
      %p109 = scmp.ne.s32.totalorder %s98, %s101
      %p110 = scmp.eq.s32.totalorder %s20, 3
      %p111 = por %p109, %p110
      %p112 = scmp.ne.s32.totalorder %s101, %s102
      %p113 = scmp.eq.s32.totalorder %s20, 0
      %p114 = por %p112, %p113
      %p115 = scmp.ne.s32.totalorder %s101, %s102
      %p116 = scmp.eq.s32.totalorder %s21, 3
      %p117 = por %p115, %p116
      %p119 = scmp.ne.s32.totalorder %s102, %s118
      %p120 = scmp.eq.s32.totalorder %s21, 0
      %p121 = por %p119, %p120
      %p122 = scmp.le.s32.totalorder 1, %s15
      %p123 = scmp.lt.s32.totalorder %s15, 5
      %p124 = pnand %p122, %p123
      %p125 = pneg %p124
      // Predicated region
      $region9: #{tpu_custom_call.1} parent=5 // pred_check
        _
      $region10: #{tpu_custom_call.1} parent=5 // pred_check_branch
        %127 = sbr.rel (%p124) target = $region12
      $region11: #{tpu_custom_call.1} parent=5 // pred_region
        %s128 = ssub.s32 %s15, 1
        // Predicated region
        $region13: #{tpu_custom_call.1} parent=11 // pred_check
          %p129 = pneg %p48
        $region14: #{tpu_custom_call.1} parent=11 // pred_check_branch
          %131 = sbr.rel (%p129) target = $region16
        $region15: #{tpu_custom_call.1} parent=11 // pred_region
          _
        $region16: #{tpu_custom_call.1} parent=11 // pred_fallthru
          _
      $region12: #{tpu_custom_call.1} parent=5 // pred_fallthru
        _
      %p132 = scmp.lt.s32.totalorder %s15, 4
      // Predicated region
      $region17: #{tpu_custom_call.1} parent=5 // pred_check
        %p133 = pneg %p132
      $region18: #{tpu_custom_call.1} parent=5 // pred_check_branch
        %135 = sbr.rel (%p133) target = $region20
      $region19: #{tpu_custom_call.1} parent=5 // pred_region
        // Predicated region
        $region21: #{tpu_custom_call.1} parent=19 // pred_check
          %p136 = pneg %p74
        $region22: #{tpu_custom_call.1} parent=19 // pred_check_branch
          %138 = sbr.rel (%p136) target = $region24
        $region23: #{tpu_custom_call.1} parent=19 // pred_region
          %s139 = sand.u32 %s64, 1
          %s140 = scalar_lea.sflag [#allocation6], %s139
          %s141 = sand.u32 %s64, 1
          %s142 = smul.addr %s141, 64
          %s143 = scalar_lea.vmem [#allocation5], %s142
          %p144 = scmp.lt.s32.totalorder %s23, 0
          %s145 = scalar_select %p144, %s23, 0
          %s146 = smul.u32 2, %s145
          %s148 = ssub.s32 1024, 1024
          %149 = vsyncadd %s140, %s148
          %s150 = smul.addr %s22, 8
          %s151 = sadd.s32 %s146, %s150
          %s152 = smul.addr %s151, 128
          %s153 = scalar_lea.hbm %s1, %s152
          %s154 = sshll.u32 %s143, 4
          %s155 = int_to_ptr.vmem [resolvable:$true] %s154
          %160 = dma.hbm_to_vmem [thread:$0]  %s153, 1024, %s155, %s140, 256, 256, 16
        $region24: #{tpu_custom_call.1} parent=19 // pred_fallthru
          _
      $region20: #{tpu_custom_call.1} parent=5 // pred_fallthru
        _
      %p161 = scmp.le.s32.totalorder 1, %s15
      %p162 = scmp.lt.s32.totalorder %s15, 5
      %p163 = pnand %p161, %p162
      %p164 = pneg %p163
      // Predicated region
      $region25: #{tpu_custom_call.1} parent=5 // pred_check
        _
      $region26: #{tpu_custom_call.1} parent=5 // pred_check_branch
        %166 = sbr.rel (%p163) target = $region28
      $region27: #{tpu_custom_call.1} parent=5 // pred_region
        %s167 = ssub.s32 %s15, 1
        %s168 = sand.u32 %s67, 1
        %s169 = scalar_lea.sflag [#allocation6], %s168
        %s170 = sand.u32 %s67, 1
        %s171 = smul.addr %s170, 64
        %s172 = scalar_lea.vmem [#allocation5], %s171
        // Predicated region
        $region29: #{tpu_custom_call.1} parent=27 // pred_check
          %p173 = pneg %p80
        $region30: #{tpu_custom_call.1} parent=27 // pred_check_branch
          %175 = sbr.rel (%p173) target = $region32
        $region31: #{tpu_custom_call.1} parent=27 // pred_region
          %176 = dma.done %s169, 1024
        $region32: #{tpu_custom_call.1} parent=27 // pred_fallthru
          _
        %p177 = pneg %p48
        %p178 = pneg %p45
        %s179 = sand.u32 %s67, 1
        %s180 = scalar_lea.sflag [#allocation6], %s179
        %s181 = sand.u32 %s67, 1
        %s182 = smul.addr %s181, 64
        %s183 = scalar_lea.vmem [#allocation5], %s182
        %p184 = pneg %p80
        %p185 = pneg %p77
        %p186 = pneg %p114
        %p187 = pneg %p111
        %s188 = sand.u32 %s101, 1
        %s189 = scalar_lea.sflag [#allocation7], %s188
        %s190 = sand.u32 %s101, 1
        %s191 = smul.addr %s190, 64
        %s192 = scalar_lea.vmem [#allocation8], %s191
        %p193 = scmp.lt.s32.totalorder %s25, 0
        %s194 = scalar_select %p193, %s25, 0
        %s195 = smul.u32 2, %s194
        %p196 = scmp.lt.s32.totalorder %s25, 1
        %s197 = ssub.s32 %s25, 1
        %s198 = scalar_select %p196, 0, %s197
        %s199 = smul.u32 2, %s198
        %p200 = scmp.lt.s32.totalorder %s25, 1
        // Predicated region
        $region33: #{tpu_custom_call.1} parent=27 // pred_check
          %p201 = pneg %p200
        $region34: #{tpu_custom_call.1} parent=27 // pred_check_branch
          %203 = sbr.rel (%p201) target = $region36
        $region35: #{tpu_custom_call.1} parent=27 // pred_region
          %p204 = scmp.eq.s32.totalorder %s25, 0
          // Predicated region
          $region37: #{tpu_custom_call.1} parent=35 // pred_check
            %p205 = pneg %p204
          $region38: #{tpu_custom_call.1} parent=35 // pred_check_branch
            %207 = sbr.rel (%p205) target = $region40
          $region39: #{tpu_custom_call.1} parent=35 // pred_region
            %vm208 = vcmask 261120
            %209 = vst.msk [vmem:[#allocation2] sm:$0xff] %vm208, 0.0
            %210 = vst.msk [vmem:[#allocation2 + $0x8] sm:$0xff] %vm208, 0.0
            %211 = vst.msk [vmem:[#allocation2 + $0x10] sm:$0xff] %vm208, 0.0
            %212 = vst.msk [vmem:[#allocation2 + $0x18] sm:$0xff] %vm208, 0.0
          $region40: #{tpu_custom_call.1} parent=35 // pred_fallthru
            _
          %v213 = vld [vmem:[%s172] sm:$0xff]
          %v214 = vld [vmem:[%s172 + $0x8] sm:$0xff]
          %v215 = vld [vmem:[%s172 + $0x10] sm:$0xff]
          %v216 = vld [vmem:[%s172 + $0x18] sm:$0xff]
          %v217 = vld [vmem:[%s172 + $0x20] sm:$0xff]
          %v218 = vld [vmem:[%s172 + $0x28] sm:$0xff]
          %v219 = vld [vmem:[%s172 + $0x30] sm:$0xff]
          %v220 = vld [vmem:[%s172 + $0x38] sm:$0xff]
          %s221 = smul.u32 %s25, 8
          %s222 = smul.addr %s221, 8
          %s223 = scalar_lea.vmem [#allocation3], %s222
          %224 = vst [vmem:[%s223] sm:$0xff] %v213
          %225 = vst [vmem:[%s223 + $0x8] sm:$0xff] %v214
          %226 = vst [vmem:[%s223 + $0x10] sm:$0xff] %v215
          %227 = vst [vmem:[%s223 + $0x18] sm:$0xff] %v216
          %228 = vst [vmem:[%s223 + $0x20] sm:$0xff] %v217
          %229 = vst [vmem:[%s223 + $0x28] sm:$0xff] %v218
          %230 = vst [vmem:[%s223 + $0x30] sm:$0xff] %v219
          %231 = vst [vmem:[%s223 + $0x38] sm:$0xff] %v220
          %v232 = vld [vmem:[#allocation2] sm:$0xff]
          %v233 = vld [vmem:[#allocation2 + $0x8] sm:$0xff]
          %v234 = vld [vmem:[#allocation2 + $0x10] sm:$0xff]
          %v235 = vld [vmem:[#allocation2 + $0x18] sm:$0xff]
          %236 = vmatprep.subr.mxu0 %v214
          %237 = vmatpush1.xpose.msra.mxu0 %v213
          %238 = vmatprep.subr.mxu0 %v216
          %239 = vmatpush1.xpose.msra.mxu0 %v215
          %240 = vmatprep.subr.mxu0 %v218
          %241 = vmatpush1.xpose.msra.mxu0 %v217
          %242 = vmatprep.subr.mxu0 %v220
          %243 = vmatpush1.xpose.msra.mxu0 %v219
          %244 = vmatprep.subr.mxu0 0.0
          %245 = vmatpush1.xpose.msra.mxu0 0.0
          %246 = vmatprep.subr.mxu0 0.0
          %247 = vmatpush1.xpose.msra.mxu0 0.0
          %248 = vmatprep.subr.mxu0 0.0
          %249 = vmatpush1.xpose.msra.mxu0 0.0
          %250 = vmatprep.subr.mxu0 0.0
          %251 = vmatpush1.xpose.msra.mxu0 0.0
          %252 = vmatprep.subr.mxu0 0.0
          %253 = vmatpush1.xpose.msra.mxu0 0.0
          %254 = vmatprep.subr.mxu0 0.0
          %255 = vmatpush1.xpose.msra.mxu0 0.0
          %256 = vmatprep.subr.mxu0 0.0
          %257 = vmatpush1.xpose.msra.mxu0 0.0
          %258 = vmatprep.subr.mxu0 0.0
          %259 = vmatpush1.xpose.msra.mxu0 0.0
          %260 = vmatprep.subr.mxu0 0.0
          %261 = vmatpush1.xpose.msra.mxu0 0.0
          %262 = vmatprep.subr.mxu0 0.0
          %263 = vmatpush1.xpose.msra.mxu0 0.0
          %264 = vmatprep.subr.mxu0 0.0
          %265 = vmatpush1.xpose.msra.mxu0 0.0
          %266 = vmatprep.subr.mxu0 0.0
          %267 = vmatpush1.xpose.msra.mxu0 0.0
          %268 = vmatprep.subr.mxu0 0.0
          %269 = vmatpush1.xpose.msra.mxu0 0.0
          %270 = vmatprep.subr.mxu0 0.0
          %271 = vmatpush1.xpose.msra.mxu0 0.0
          %272 = vmatprep.subr.mxu0 0.0
          %273 = vmatpush1.xpose.msra.mxu0 0.0
          %274 = vmatprep.subr.mxu0 0.0
          %275 = vmatpush1.xpose.msra.mxu0 0.0
          %276 = vmatprep.subr.mxu0 0.0
          %277 = vmatpush1.xpose.msra.mxu0 0.0
          %278 = vmatprep.subr.mxu0 0.0
          %279 = vmatpush1.xpose.msra.mxu0 0.0
          %280 = vmatprep.subr.mxu0 0.0
          %281 = vmatpush1.xpose.msra.mxu0 0.0
          %282 = vmatprep.subr.mxu0 0.0
          %283 = vmatpush1.xpose.msra.mxu0 0.0
          %284 = vmatprep.subr.mxu0 0.0
          %285 = vmatpush1.xpose.msra.mxu0 0.0
          %286 = vmatprep.subr.mxu0 0.0
          %287 = vmatpush1.xpose.msra.mxu0 0.0
          %288 = vmatprep.subr.mxu0 0.0
          %289 = vmatpush1.xpose.msra.mxu0 0.0
          %290 = vmatprep.subr.mxu0 0.0
          %291 = vmatpush1.xpose.msra.mxu0 0.0
          %292 = vmatprep.subr.mxu0 0.0
          %293 = vmatpush1.xpose.msra.mxu0 0.0
          %294 = vmatprep.subr.mxu0 0.0
          %295 = vmatpush1.xpose.msra.mxu0 0.0
          %296 = vmatprep.subr.mxu0 0.0
          %297 = vmatpush1.xpose.msra.mxu0 0.0
          %298 = vmatprep.subr.mxu0 0.0
          %299 = vmatpush1.xpose.msra.mxu0 0.0
          %300 = vmatprep.mubr.f32.mxu0 %v214
          %301 = vmatmul.mubr.f32.gmra.mrb[0].mxu0 %v213
          %v302 = vpop.f32.mrb[0].mxu0
          %v303 = vadd.f32 0.0, %v302
          %v304 = vpop.f32.mrb[0].mxu0
          %305 = vmatprep.mubr.f32.mxu0 %v216
          %306 = vmatmul.mubr.f32.gmra.mrb[0].mxu0 %v215
          %v307 = vpop.f32.mrb[0].mxu0
          %v308 = vadd.f32 0.0, %v307
          %v309 = vpop.f32.mrb[0].mxu0
          %310 = vmatprep.mubr.f32.mxu0 %v218
          %311 = vmatmul.mubr.f32.gmra.mrb[0].mxu0 %v217
          %v312 = vpop.f32.mrb[0].mxu0
          %v313 = vadd.f32 0.0, %v312
          %v314 = vpop.f32.mrb[0].mxu0
          %315 = vmatprep.mubr.f32.mxu0 %v220
          %316 = vmatmul.mubr.f32.gmra.mrb[0].mxu0 %v219
          %v317 = vpop.f32.mrb[0].mxu0
          %v318 = vadd.f32 0.0, %v317
          %v319 = vpop.f32.mrb[0].mxu0
          %320 = vdwg.mxu0
          %v321 = vadd.f32 %v232, %v303
          %v322 = vadd.f32 %v233, %v308
          %v323 = vadd.f32 %v234, %v313
          %v324 = vadd.f32 %v235, %v318
          %vm325 = vcmask 261120
          %326 = vst.msk [vmem:[#allocation2] sm:$0xff] %vm325, %v321
          %327 = vst.msk [vmem:[#allocation2 + $0x8] sm:$0xff] %vm325, %v322
          %328 = vst.msk [vmem:[#allocation2 + $0x10] sm:$0xff] %vm325, %v323
          %329 = vst.msk [vmem:[#allocation2 + $0x18] sm:$0xff] %vm325, %v324
          // Predicated region
          $region41: #{tpu_custom_call.1} parent=35 // pred_check
            %p330 = pneg %p204
          $region42: #{tpu_custom_call.1} parent=35 // pred_check_branch
            %332 = sbr.rel (%p330) target = $region44
          $region43: #{tpu_custom_call.1} parent=35 // pred_region
            %v333 = vld [vmem:[#allocation2] sm:$0xff]
            %v334 = vld [vmem:[#allocation2 + $0x8] sm:$0xff]
            %v335 = vld [vmem:[#allocation2 + $0x10] sm:$0xff]
            %v336 = vld [vmem:[#allocation2 + $0x18] sm:$0xff]
            %v337 = vsel %vm325, %v333, inf
            %338 = vmin.xlane.f32.xlu0 %v337
            %v339 = vpop.xlane.xlu0 %338
            %v340 = vsel %vm325, %v334, inf
            %341 = vmin.xlane.f32.xlu0 %v340
            %v342 = vpop.xlane.xlu0 %341
            %v343 = vsel %vm325, %v335, inf
            %344 = vmin.xlane.f32.xlu0 %v343
            %v345 = vpop.xlane.xlu0 %344
            %v346 = vsel %vm325, %v336, inf
            %347 = vmin.xlane.f32.xlu0 %v346
            %v348 = vpop.xlane.xlu0 %347
            %v349 = vsub.f32 %v339, %v333
            %v350 = vsub.f32 %v342, %v334
            %v351 = vsub.f32 %v345, %v335
            %v352 = vsub.f32 %v348, %v336
            %v353 = vmul.f32 %v349, 1.442695
            %v354 = vpow.pop %v353
            %v355 = vmul.f32 %v350, 1.442695
            %v356 = vpow.pop %v355
            %v357 = vmul.f32 %v351, 1.442695
            %v358 = vpow.pop %v357
            %v359 = vmul.f32 %v352, 1.442695
            %v360 = vpow.pop %v359
            %v361 = vsel %vm325, %v354, 0.0
            %362 = vadd.xlane.f32.xlu0 %v361
            %v363 = vpop.xlane.xlu0 %362
            %v364 = vsel %vm325, %v356, 0.0
            %365 = vadd.xlane.f32.xlu0 %v364
            %v366 = vpop.xlane.xlu0 %365
            %v367 = vsel %vm325, %v358, 0.0
            %368 = vadd.xlane.f32.xlu0 %v367
            %v369 = vpop.xlane.xlu0 %368
            %v370 = vsel %vm325, %v360, 0.0
            %371 = vadd.xlane.f32.xlu0 %v370
            %v372 = vpop.xlane.xlu0 %371
            %v373 = vrcp.pop %v363
            %v374 = vrcp.pop %v366
            %v375 = vrcp.pop %v369
            %v376 = vrcp.pop %v372
            %v377 = vmul.f32 %v354, %v373
            %v378 = vmul.f32 %v356, %v374
            %v379 = vmul.f32 %v358, %v375
            %v380 = vmul.f32 %v360, %v376
            %381 = vst.msk [vmem:[#allocation2] sm:$0xff] %vm325, %v377
            %382 = vst.msk [vmem:[#allocation2 + $0x8] sm:$0xff] %vm325, %v378
            %383 = vst.msk [vmem:[#allocation2 + $0x10] sm:$0xff] %vm325, %v379
            %384 = vst.msk [vmem:[#allocation2 + $0x18] sm:$0xff] %vm325, %v380
          $region44: #{tpu_custom_call.1} parent=35 // pred_fallthru
            _
        $region36: #{tpu_custom_call.1} parent=27 // pred_fallthru
          _
        %p385 = scmp.ge.s32.totalorder %s25, 1
        // Predicated region
        $region45: #{tpu_custom_call.1} parent=27 // pred_check
          %p386 = pneg %p385
        $region46: #{tpu_custom_call.1} parent=27 // pred_check_branch
          %388 = sbr.rel (%p386) target = $region48
        $region47: #{tpu_custom_call.1} parent=27 // pred_region
          %s389 = ssub.s32 %s25, 1
          %s390 = smul.u32 %s389, 8
          %s391 = smul.addr %s390, 8
          %s392 = scalar_lea.vmem [#allocation3], %s391
          %v393 = vld [vmem:[%s392] sm:$0xff]
          %v394 = vld [vmem:[%s392 + $0x8] sm:$0xff]
          %v395 = vld [vmem:[%s392 + $0x10] sm:$0xff]
          %v396 = vld [vmem:[%s392 + $0x18] sm:$0xff]
          %v397 = vld [vmem:[%s392 + $0x20] sm:$0xff]
          %v398 = vld [vmem:[%s392 + $0x28] sm:$0xff]
          %v399 = vld [vmem:[%s392 + $0x30] sm:$0xff]
          %v400 = vld [vmem:[%s392 + $0x38] sm:$0xff]
          %v401 = vld [vmem:[#allocation2] sm:$0xff]
          %v402 = vld [vmem:[#allocation2 + $0x8] sm:$0xff]
          %v403 = vld [vmem:[#allocation2 + $0x10] sm:$0xff]
          %v404 = vld [vmem:[#allocation2 + $0x18] sm:$0xff]
          %vm405 = vcmask 261120
          %v407 = vsel %vm405, %v401, 0
          %v410 = vsel %vm405, %v402, 0
          %v413 = vsel %vm405, %v403, 0
          %v416 = vsel %vm405, %v404, 0
          %418 = vmatprep.subr.mxu0 %v394
          %419 = vmatpush1.msra.mxu0 %v393
          %420 = vmatprep.subr.mxu0 %v396
          %421 = vmatpush1.msra.mxu0 %v395
          %422 = vmatprep.subr.mxu0 %v398
          %423 = vmatpush1.msra.mxu0 %v397
          %424 = vmatprep.subr.mxu0 %v400
          %425 = vmatpush1.msra.mxu0 %v399
          %426 = vmatprep.subr.mxu0 0.0
          %427 = vmatpush1.msra.mxu0 0.0
          %428 = vmatprep.subr.mxu0 0.0
          %429 = vmatpush1.msra.mxu0 0.0
          %430 = vmatprep.subr.mxu0 0.0
          %431 = vmatpush1.msra.mxu0 0.0
          %432 = vmatprep.subr.mxu0 0.0
          %433 = vmatpush1.msra.mxu0 0.0
          %434 = vmatprep.subr.mxu0 0.0
          %435 = vmatpush1.msra.mxu0 0.0
          %436 = vmatprep.subr.mxu0 0.0
          %437 = vmatpush1.msra.mxu0 0.0
          %438 = vmatprep.subr.mxu0 0.0
          %439 = vmatpush1.msra.mxu0 0.0
          %440 = vmatprep.subr.mxu0 0.0
          %441 = vmatpush1.msra.mxu0 0.0
          %442 = vmatprep.subr.mxu0 0.0
          %443 = vmatpush1.msra.mxu0 0.0
          %444 = vmatprep.subr.mxu0 0.0
          %445 = vmatpush1.msra.mxu0 0.0
          %446 = vmatprep.subr.mxu0 0.0
          %447 = vmatpush1.msra.mxu0 0.0
          %448 = vmatprep.subr.mxu0 0.0
          %449 = vmatpush1.msra.mxu0 0.0
          %450 = vmatprep.subr.mxu0 0.0
          %451 = vmatpush1.msra.mxu0 0.0
          %452 = vmatprep.subr.mxu0 0.0
          %453 = vmatpush1.msra.mxu0 0.0
          %454 = vmatprep.subr.mxu0 0.0
          %455 = vmatpush1.msra.mxu0 0.0
          %456 = vmatprep.subr.mxu0 0.0
          %457 = vmatpush1.msra.mxu0 0.0
          %458 = vmatprep.subr.mxu0 0.0
          %459 = vmatpush1.msra.mxu0 0.0
          %460 = vmatprep.subr.mxu0 0.0
          %461 = vmatpush1.msra.mxu0 0.0
          %462 = vmatprep.subr.mxu0 0.0
          %463 = vmatpush1.msra.mxu0 0.0
          %464 = vmatprep.subr.mxu0 0.0
          %465 = vmatpush1.msra.mxu0 0.0
          %466 = vmatprep.subr.mxu0 0.0
          %467 = vmatpush1.msra.mxu0 0.0
          %468 = vmatprep.subr.mxu0 0.0
          %469 = vmatpush1.msra.mxu0 0.0
          %470 = vmatprep.subr.mxu0 0.0
          %471 = vmatpush1.msra.mxu0 0.0
          %472 = vmatprep.subr.mxu0 0.0
          %473 = vmatpush1.msra.mxu0 0.0
          %474 = vmatprep.subr.mxu0 0.0
          %475 = vmatpush1.msra.mxu0 0.0
          %476 = vmatprep.subr.mxu0 0.0
          %477 = vmatpush1.msra.mxu0 0.0
          %478 = vmatprep.subr.mxu0 0.0
          %479 = vmatpush1.msra.mxu0 0.0
          %480 = vmatprep.subr.mxu0 0.0
          %481 = vmatpush1.msra.mxu0 0.0
          %482 = vmatprep.mubr.f32.mxu0 0.0
          %483 = vmatmul.mubr.f32.gmra.mrb[0].mxu0 %v407
          %v484 = vpop.f32.mrb[0].mxu0
          %v485 = vadd.f32 0.0, %v484
          %v486 = vpop.f32.mrb[0].mxu0
          %v487 = vadd.f32 0.0, %v486
          %488 = vmatprep.mubr.f32.mxu0 0.0
          %489 = vmatmul.mubr.f32.gmra.mrb[0].mxu0 %v410
          %v490 = vpop.f32.mrb[0].mxu0
          %v491 = vadd.f32 0.0, %v490
          %v492 = vpop.f32.mrb[0].mxu0
          %v493 = vadd.f32 0.0, %v492
          %494 = vmatprep.mubr.f32.mxu0 0.0
          %495 = vmatmul.mubr.f32.gmra.mrb[0].mxu0 %v413
          %v496 = vpop.f32.mrb[0].mxu0
          %v497 = vadd.f32 0.0, %v496
          %v498 = vpop.f32.mrb[0].mxu0
          %v499 = vadd.f32 0.0, %v498
          %500 = vmatprep.mubr.f32.mxu0 0.0
          %501 = vmatmul.mubr.f32.gmra.mrb[0].mxu0 %v416
          %v502 = vpop.f32.mrb[0].mxu0
          %v503 = vadd.f32 0.0, %v502
          %v504 = vpop.f32.mrb[0].mxu0
          %v505 = vadd.f32 0.0, %v504
          %506 = vdwg.mxu0
          %s507 = sld [smem:[#allocation4]]
          %v508 = vstv %s507
          %v509 = vmul.f32 %v508, %v485
          %v510 = vmul.f32 %v508, %v487
          %v511 = vmul.f32 %v508, %v491
          %v512 = vmul.f32 %v508, %v493
          %v513 = vmul.f32 %v508, %v497
          %v514 = vmul.f32 %v508, %v499
          %v515 = vmul.f32 %v508, %v503
          %v516 = vmul.f32 %v508, %v505
          %v517 = vadd.f32 %v509, %v393
          %v518 = vadd.f32 %v510, %v394
          %v519 = vadd.f32 %v511, %v395
          %v520 = vadd.f32 %v512, %v396
          %v521 = vadd.f32 %v513, %v397
          %v522 = vadd.f32 %v514, %v398
          %v523 = vadd.f32 %v515, %v399
          %v524 = vadd.f32 %v516, %v400
          %525 = vst [vmem:[%s192] sm:$0xff] %v517
          %526 = vst [vmem:[%s192 + $0x8] sm:$0xff] %v518
          %527 = vst [vmem:[%s192 + $0x10] sm:$0xff] %v519
          %528 = vst [vmem:[%s192 + $0x18] sm:$0xff] %v520
          %529 = vst [vmem:[%s192 + $0x20] sm:$0xff] %v521
          %530 = vst [vmem:[%s192 + $0x28] sm:$0xff] %v522
          %531 = vst [vmem:[%s192 + $0x30] sm:$0xff] %v523
          %532 = vst [vmem:[%s192 + $0x38] sm:$0xff] %v524
        $region48: #{tpu_custom_call.1} parent=27 // pred_fallthru
          _
        %s533 = sand.u32 %s101, 1
        %s534 = scalar_lea.sflag [#allocation7], %s533
        %s535 = sand.u32 %s101, 1
        %s536 = smul.addr %s535, 64
        %s537 = scalar_lea.vmem [#allocation8], %s536
        // Predicated region
        $region49: #{tpu_custom_call.1} parent=27 // pred_check
          %p538 = pneg %p111
        $region50: #{tpu_custom_call.1} parent=27 // pred_check_branch
          %540 = sbr.rel (%p538) target = $region52
        $region51: #{tpu_custom_call.1} parent=27 // pred_region
          %p541 = scmp.lt.s32.totalorder %s25, 1
          %s542 = ssub.s32 %s25, 1
          %s543 = scalar_select %p541, 0, %s542
          %s544 = smul.u32 2, %s543
          %s546 = ssub.s32 1024, 1024
          %547 = vsyncadd %s534, %s546
          %s548 = smul.addr %s24, 8
          %s549 = sadd.s32 %s544, %s548
          %s550 = smul.addr %s549, 128
          %s551 = scalar_lea.hbm %s2, %s550
          %s552 = sshll.u32 %s537, 4
          %s553 = int_to_ptr.vmem [resolvable:$true] %s552
          %558 = dma.vmem_to_hbm [thread:$0]  %s553, 1024, %s551, %s534, 256, 256, 16
        $region52: #{tpu_custom_call.1} parent=27 // pred_fallthru
          _
      $region28: #{tpu_custom_call.1} parent=5 // pred_fallthru
        _
      %p559 = scmp.le.s32.totalorder 2, %s15
      // Predicated region
      $region53: #{tpu_custom_call.1} parent=5 // pred_check
        %p560 = pneg %p559
      $region54: #{tpu_custom_call.1} parent=5 // pred_check_branch
        %562 = sbr.rel (%p560) target = $region56
      $region55: #{tpu_custom_call.1} parent=5 // pred_region
        %s563 = ssub.s32 %s15, 2
        // Predicated region
        $region57: #{tpu_custom_call.1} parent=55 // pred_check
          %p564 = pneg %p117
        $region58: #{tpu_custom_call.1} parent=55 // pred_check_branch
          %566 = sbr.rel (%p564) target = $region60
        $region59: #{tpu_custom_call.1} parent=55 // pred_region
          %s567 = sand.u32 %s102, 1
          %s568 = scalar_lea.sflag [#allocation7], %s567
          %s569 = sand.u32 %s102, 1
          %s570 = smul.addr %s569, 64
          %s571 = scalar_lea.vmem [#allocation8], %s570
          %572 = dma.done %s568, 1024
        $region60: #{tpu_custom_call.1} parent=55 // pred_fallthru
          _
      $region56: #{tpu_custom_call.1} parent=5 // pred_fallthru
        _
    $region6: #{tpu_custom_call.1} parent=1 // loop_footer
      %s19 = sadd.s32 1, %s15
    $region7: #{tpu_custom_call.1} parent=1 // loop_footer_branch
      %14 = sbr.rel target = $region3
    $region8: #{tpu_custom_call.1} parent=1 // loop_exit
      _
    %573 = vsyncpa [#allocation6], 1
    %s574 = scalar_lea.sflag [#allocation6], 1
    %575 = vsyncpa %s574, 1
    %576 = vsyncpa [#allocation7], 1
    %s577 = scalar_lea.sflag [#allocation7], 1
    %578 = vsyncpa %s577, 1

</llo_original>
